<compile_context>
chip_gen: v7x
topology: tpu7x:2x2x1
jax: 0.10.0
libtpu: 0.0.40
codegen_flags: <defaults>
</compile_context>

<pallas_src>
import functools

import jax
import jax.numpy as jnp
from jax import lax
from jax.experimental import pallas as pl
from jax.experimental.pallas import tpu as pltpu

VOCAB = 23            # nn.Embedding(23, emb_dim)
VOCAB_PAD = 32        # pad vocab rows for clean tiling (extra rows zero / never hit)
EMB_DIM = 32          # config.emb_dim for this synthetic run
MAX_BATCH_TILE = 512  # batch rows per grid step (lane axis of transposed output)
SEQ_CHUNK = 128       # sequence chunk: bounds the one-hot VMEM intermediate (v7x)


def data_encoder_kernel(idx_ref, emb_t_ref, out_ref, *, l_chunk):
    # idx_ref:   (L_pad, TB) int32  -- L on sublanes, batch TB on lanes
    # emb_t_ref: (D, V) bf16/f32    -- transposed table, resident across steps
    # out_ref:   (D, TB) float32    -- lane-dense (TB is a multiple of 128)
    L_pad, TB = idx_ref.shape
    D, V = emb_t_ref.shape
    n_chunks = L_pad // l_chunk

    # Loop-invariant vocab iota, hoisted out of the chunk loop (JAX does not
    # CSE broadcast_in_dim).  Layout matches idx: l_chunk -> sublanes,
    # TB -> lanes, V is the 3rd-minor dim -> no relayout, lane-dense compare.
    vocab_iota = lax.broadcasted_iota(jnp.int32, (V, l_chunk, TB), 0)

    def chunk_counts(start):
        idx_chunk = idx_ref[pl.ds(start, l_chunk), :]           # (l_chunk, TB)
        onehot = idx_chunk[None, :, :] == vocab_iota            # (V, l_chunk, TB)
        # f32 compare/reduce path (v5e has no bf16 VPU); counts exact in f32.
        return jnp.sum(onehot.astype(jnp.float32), axis=1)      # (V, TB)

    if n_chunks == 1:
        counts_t = chunk_counts(0)
    else:
        def body(c, acc):
            start = pl.multiple_of(c * l_chunk, l_chunk)
            return acc + chunk_counts(start)
        counts_t = lax.fori_loop(0, n_chunks, body,
                                 jnp.zeros((V, TB), jnp.float32))

    # Embedding-sum as one MXU matmul, transposed so the output is lane-dense:
    #   (D, V) @ (V, TB) -> (D, TB) with TB on the 128-lane axis.
    # Operand dtype (bf16 vs f32) was chosen statically in the wrapper; counts
    # are only exact in bf16 while L <= 256.
    summed = jnp.dot(emb_t_ref[...], counts_t.astype(emb_t_ref.dtype),
                     preferred_element_type=jnp.float32)        # (D, TB) f32
    out_ref[...] = jnp.tanh(summed).astype(out_ref.dtype)


def data_encoder(idx, emb_table, *, max_batch_tile=MAX_BATCH_TILE):
    """idx: (B, L) int, emb_table: (VOCAB_PAD, D) float32 -> (B, D) float32."""
    B, L = idx.shape
    V, D = emb_table.shape

    # --- sequence padding / chunking -------------------------------------
    if L > SEQ_CHUNK:
        l_chunk = SEQ_CHUNK
    else:
        l_chunk = ((L + 7) // 8) * 8          # small L: one sublane-aligned chunk
    L_pad = pl.cdiv(L, l_chunk) * l_chunk
    # Padded positions use token 0 == padding_idx, whose table row is zero, so
    # they contribute nothing to the embedding sum.

    # --- batch padding / tiling (lane-dense output) ----------------------
    B_lane = ((B + 127) // 128) * 128          # batch lives on the 128-lane axis
    batch_tile = min(B_lane, max_batch_tile)
    n_tiles = pl.cdiv(B_lane, batch_tile)
    B_pad = n_tiles * batch_tile

    # Wrapper-side layout plumbing (free): transpose idx so batch sits on
    # lanes inside the kernel; pad batch rows with token 0 (sliced off below).
    idx_t = jnp.pad(idx.astype(jnp.int32).T, ((0, L_pad - L), (0, B_pad - B)))

    # One-time weight transform: transposed table, bf16 when counts are exact
    # in bf16 (L <= 256), else f32 (MXU cost at K=N=32 is irrelevant).
    mat_dtype = jnp.bfloat16 if L_pad <= 256 else jnp.float32
    emb_t = emb_table.T.astype(mat_dtype)      # (D, V)

    kernel = functools.partial(data_encoder_kernel, l_chunk=l_chunk)

    out_t = pl.pallas_call(
        kernel,
        out_shape=jax.ShapeDtypeStruct((D, B_pad), jnp.float32),
        grid=(n_tiles,),
        in_specs=[
            pl.BlockSpec((L_pad, batch_tile), lambda i: (0, i)),  # pipelined idx tile
            pl.BlockSpec((D, V), lambda i: (0, 0)),               # table stays resident
        ],
        out_specs=pl.BlockSpec((D, batch_tile), lambda i: (0, i)),
        compiler_params=pltpu.CompilerParams(
            # Batch grid steps are independent.
            # TODO(synk): switch to pltpu.CORE_PARALLEL once the grid has >= 2
            # sizeable steps to split them across v7x's two TensorCores.
            dimension_semantics=(pltpu.PARALLEL,)
        ),
    )(idx_t, emb_t)

    return out_t.T[:B]                          # (B, D)


def make_embedding_table(key, vocab=VOCAB, vocab_pad=VOCAB_PAD, dim=EMB_DIM):
    # Deterministic xavier-uniform-style init, row 0 zeroed (padding_idx=0).
    bound = (6.0 / (vocab + dim)) ** 0.5
    w = jax.random.uniform(key, (vocab, dim), jnp.float32, -bound, bound)
    w = w.at[0].set(0.0)                        # padding_idx=0
    pad = jnp.zeros((vocab_pad - vocab, dim), jnp.float32)
    return jnp.concatenate([w, pad], axis=0)    # (vocab_pad, dim)


def reference(idx, emb_table):
    emb = emb_table[idx]                        # (B, L, D) gather, f32
    return jnp.tanh(emb.sum(axis=1))


if __name__ == "__main__":
    key = jax.random.PRNGKey(0)
    k_emb, k_idx = jax.random.split(key)

    # Small shapes consistent with the module: B=16 rows of L=8 tokens.
    B, L = 16, 8
    emb_table = make_embedding_table(k_emb)
    idx = jax.random.randint(k_idx, (B, L), 0, VOCAB, dtype=jnp.int32)

    out = data_encoder(idx, emb_table)
    out = jax.block_until_ready(out)

    ref = reference(idx, emb_table)
    assert out.shape == (B, EMB_DIM)
    # bf16 table operand on the MXU -> ~1e-2 worst-case abs error vs f32 ref.
    assert jnp.allclose(out, ref, atol=2e-2, rtol=2e-2)

    print("KERNEL_OK")
</pallas_src>

<mosaic_0001>
module attributes {stable_mosaic.version = 11 : i64} {
  func.func @data_encoder_kernel(%arg0: i32, %arg1: memref<8x128xi32, #tpu.memory_space<vmem>>, %arg2: memref<32x32xbf16, #tpu.memory_space<vmem>>, %arg3: memref<32x128xf32, #tpu.memory_space<vmem>>) attributes {dimension_semantics = [#tpu.dimension_semantics<parallel>], iteration_bounds = array<i64: 1>, scalar_prefetch = 0 : i64, scratch_operands = 0 : i64, tpu.core_type = #tpu.core_type<tc>, window_params = [{transform_indices = @transform_0, window_bounds = array<i64: 8, 128>}, {pipeline_mode = #tpu.pipeline_mode<synchronous>, transform_indices = @transform_1, window_bounds = array<i64: 32, 32>}, {transform_indices = @transform_2, window_bounds = array<i64: 32, 128>}]} {
    %0 = tpu.iota {dimensions = array<i32: 0>} : vector<32x8x128xi32>
    %c0 = arith.constant 0 : index
    %c0_0 = arith.constant 0 : index
    %1 = vector.load %arg1[%c0, %c0_0] : memref<8x128xi32, #tpu.memory_space<vmem>>, vector<8x128xi32>
    %2 = vector.shape_cast %1 : vector<8x128xi32> to vector<1x8x128xi32>
    %3 = vector.broadcast %2 : vector<1x8x128xi32> to vector<32x8x128xi32>
    %4 = arith.cmpi eq, %3, %0 : vector<32x8x128xi32>
    %5 = arith.extui %4 : vector<32x8x128xi1> to vector<32x8x128xi32>
    %6 = arith.sitofp %5 : vector<32x8x128xi32> to vector<32x8x128xf32>
    %cst = arith.constant dense<0.000000e+00> : vector<32x128xf32>
    %7 = vector.multi_reduction <add>, %6, %cst [1] : vector<32x8x128xf32> to vector<32x128xf32>
    %c0_1 = arith.constant 0 : index
    %c0_2 = arith.constant 0 : index
    %8 = vector.load %arg2[%c0_1, %c0_2] : memref<32x32xbf16, #tpu.memory_space<vmem>>, vector<32x32xbf16>
    %9 = arith.truncf %7 : vector<32x128xf32> to vector<32x128xbf16>
    %cst_3 = arith.constant dense<0.000000e+00> : vector<32x128xf32>
    %10 = tpu.matmul %8, %9, %cst_3 {dimension_numbers = #tpu.dot_dimension_numbers<[1], [0], [0], [1], [0, 0, 1, 1], [], []>} : vector<32x32xbf16>, vector<32x128xbf16>, vector<32x128xf32> -> vector<32x128xf32>
    %11 = math.tanh %10 : vector<32x128xf32>
    %c0_4 = arith.constant 0 : index
    %c0_5 = arith.constant 0 : index
    %12 = vector.load %arg3[%c0_4, %c0_5] : memref<32x128xf32, #tpu.memory_space<vmem>>, vector<32x128xf32>
    tpu.vector_store %arg3[%c0_4, %c0_5], %11 {strides = array<i32>} : memref<32x128xf32, #tpu.memory_space<vmem>>, vector<32x128xf32>,
    return
  }
  func.func @transform_0(%arg0: i32) -> (i32, i32) {
    %c0_i32 = arith.constant 0 : i32
    %c0_i32_0 = arith.constant 0 : i32
    return %c0_i32, %arg0 : i32, i32
  }
  func.func @transform_1(%arg0: i32) -> (i32, i32) {
    %c0_i32 = arith.constant 0 : i32
    %c0_i32_0 = arith.constant 0 : i32
    %c0_i32_1 = arith.constant 0 : i32
    return %c0_i32, %c0_i32_0 : i32, i32
  }
  func.func @transform_2(%arg0: i32) -> (i32, i32) {
    %c0_i32 = arith.constant 0 : i32
    %c0_i32_0 = arith.constant 0 : i32
    return %c0_i32, %arg0 : i32, i32
  }
}

</mosaic_0001>

<llo_original>
// kernel: tpu_custom_call.1
$region0: #{tpu_custom_call.1}
  #allocation0 [shape = 'u32[]', space=smem, size = 0x4, offset = 0x4, fixed_abs, tag = 'smem constant byte address 0x4 - core index']
  #allocation1 [shape = 'u32[144,128]{1,0:T(1,128)}', space=vmem, size = 0x12000, scoped, tag = 'internal scratch']
  %s0 = inlined_call_operand.hbm [shape: s32[8,128], index: 0, kind: input, shape index: {}]
  %s1 = inlined_call_operand.hbm [shape: bf16[32,32], index: 1, kind: input, shape index: {}]
  %s2 = inlined_call_operand.hbm [shape: f32[32,128], index: 2, kind: output, shape index: {}]
  %s3 = sld [smem:[#allocation0]]
  $region26: #{tpu_custom_call.1} parent=0
    _
  %s5 = ssub.s32 1, %s3
  %s6 = scalar_select 0, %s5, %s3
  $region1: #{tpu_custom_call.1} parent=0
    #allocation2 [shape = 'u8[4096]{0}', space=vmem, size = 0x1000, scoped, tag = 'input window, operand 0, single buffered']
    #allocation3 [shape = 's32[1]{0}', space=sflag, size = 0x4, scoped, tag = 'scoped memory for tpu_custom_call.1']
    #allocation4 [shape = 's32[1]{0}', space=sflag, size = 0x4, scoped, tag = 'scoped memory for tpu_custom_call.1']
    #allocation5 [shape = 'u8[8192]{0}', space=vmem, size = 0x2000, scoped, tag = 'input window, operand 1, single buffered']
    #allocation6 [shape = 's32[1]{0}', space=sflag, size = 0x4, scoped, tag = 'scoped memory for tpu_custom_call.1']
    #allocation7 [shape = 'u8[16384]{0}', space=vmem, size = 0x4000, scoped, tag = 'output window, operand 0, single buffered']
    %7 = vsyncpa [#allocation3], 0
    %8 = vsyncpa [#allocation6], 0
    %9 = vsyncpa [#allocation4], 0
    // Predicated region
    $region2: #{tpu_custom_call.1} parent=1 // pred_check
      _
    $region3: #{tpu_custom_call.1} parent=1 // pred_check_branch
      %11 = sbr.rel (0) target = $region5
    $region4: #{tpu_custom_call.1} parent=1 // pred_region
      %s13 = ssub.s32 128, 128
      %14 = vsyncadd [#allocation3], %s13
      %s16 = sshll.u32 [#allocation2], 4
      %s17 = int_to_ptr.vmem [resolvable:$true] %s16
      %19 = dma.hbm_to_vmem [thread:$0]  %s0, 128, %s17, [#allocation3]
    $region5: #{tpu_custom_call.1} parent=1 // pred_fallthru
      _
    // Predicated region
    $region6: #{tpu_custom_call.1} parent=1 // pred_check
      _
    $region7: #{tpu_custom_call.1} parent=1 // pred_check_branch
      %21 = sbr.rel (0) target = $region9
    $region8: #{tpu_custom_call.1} parent=1 // pred_region
      %s23 = ssub.s32 256, 256
      %24 = vsyncadd [#allocation6], %s23
      %s25 = sshll.u32 [#allocation5], 4
      %s26 = int_to_ptr.vmem [resolvable:$true] %s25
      %31 = dma.hbm_to_vmem [thread:$0]  %s1, 256, %s26, [#allocation6], 64, 64, 4
    $region9: #{tpu_custom_call.1} parent=1 // pred_fallthru
      _
    // Predicated region
    $region10: #{tpu_custom_call.1} parent=1 // pred_check
      _
    $region11: #{tpu_custom_call.1} parent=1 // pred_check_branch
      %33 = sbr.rel (0) target = $region13
    $region12: #{tpu_custom_call.1} parent=1 // pred_region
      %34 = dma.done [#allocation3], 128
    $region13: #{tpu_custom_call.1} parent=1 // pred_fallthru
      _
    // Predicated region
    $region14: #{tpu_custom_call.1} parent=1 // pred_check
      _
    $region15: #{tpu_custom_call.1} parent=1 // pred_check_branch
      %36 = sbr.rel (0) target = $region17
    $region16: #{tpu_custom_call.1} parent=1 // pred_region
      %37 = dma.done [#allocation6], 256
    $region17: #{tpu_custom_call.1} parent=1 // pred_fallthru
      _
    %v39 = vld [vmem:[#allocation2] sm:$0xff]
    %vm40 = vcmp.eq.s32.totalorder %v39, 0
    %vm41 = vcmp.eq.s32.totalorder %v39, 1
    %vm42 = vcmp.eq.s32.totalorder %v39, 2
    %vm43 = vcmp.eq.s32.totalorder %v39, 3
    %vm44 = vcmp.eq.s32.totalorder %v39, 4
    %vm45 = vcmp.eq.s32.totalorder %v39, 5
    %vm46 = vcmp.eq.s32.totalorder %v39, 6
    %vm47 = vcmp.eq.s32.totalorder %v39, 7
    %vm48 = vcmp.eq.s32.totalorder %v39, 8
    %vm49 = vcmp.eq.s32.totalorder %v39, 9
    %vm50 = vcmp.eq.s32.totalorder %v39, 10
    %vm51 = vcmp.eq.s32.totalorder %v39, 11
    %vm52 = vcmp.eq.s32.totalorder %v39, 12
    %vm53 = vcmp.eq.s32.totalorder %v39, 13
    %vm54 = vcmp.eq.s32.totalorder %v39, 14
    %vm55 = vcmp.eq.s32.totalorder %v39, 15
    %vm56 = vcmp.eq.s32.totalorder %v39, 16
    %vm57 = vcmp.eq.s32.totalorder %v39, 17
    %vm58 = vcmp.eq.s32.totalorder %v39, 18
    %vm59 = vcmp.eq.s32.totalorder %v39, 19
    %vm60 = vcmp.eq.s32.totalorder %v39, 20
    %vm61 = vcmp.eq.s32.totalorder %v39, 21
    %vm62 = vcmp.eq.s32.totalorder %v39, 22
    %vm63 = vcmp.eq.s32.totalorder %v39, 23
    %vm64 = vcmp.eq.s32.totalorder %v39, 24
    %vm65 = vcmp.eq.s32.totalorder %v39, 25
    %vm66 = vcmp.eq.s32.totalorder %v39, 26
    %vm67 = vcmp.eq.s32.totalorder %v39, 27
    %vm68 = vcmp.eq.s32.totalorder %v39, 28
    %vm69 = vcmp.eq.s32.totalorder %v39, 29
    %vm70 = vcmp.eq.s32.totalorder %v39, 30
    %vm71 = vcmp.eq.s32.totalorder %v39, 31
    %v72 = vsel %vm40, 1, 0
    %v73 = vsel %vm41, 1, 0
    %v74 = vsel %vm42, 1, 0
    %v75 = vsel %vm43, 1, 0
    %v76 = vsel %vm44, 1, 0
    %v77 = vsel %vm45, 1, 0
    %v78 = vsel %vm46, 1, 0
    %v79 = vsel %vm47, 1, 0
    %v80 = vsel %vm48, 1, 0
    %v81 = vsel %vm49, 1, 0
    %v82 = vsel %vm50, 1, 0
    %v83 = vsel %vm51, 1, 0
    %v84 = vsel %vm52, 1, 0
    %v85 = vsel %vm53, 1, 0
    %v86 = vsel %vm54, 1, 0
    %v87 = vsel %vm55, 1, 0
    %v88 = vsel %vm56, 1, 0
    %v89 = vsel %vm57, 1, 0
    %v90 = vsel %vm58, 1, 0
    %v91 = vsel %vm59, 1, 0
    %v92 = vsel %vm60, 1, 0
    %v93 = vsel %vm61, 1, 0
    %v94 = vsel %vm62, 1, 0
    %v95 = vsel %vm63, 1, 0
    %v96 = vsel %vm64, 1, 0
    %v97 = vsel %vm65, 1, 0
    %v98 = vsel %vm66, 1, 0
    %v99 = vsel %vm67, 1, 0
    %v100 = vsel %vm68, 1, 0
    %v101 = vsel %vm69, 1, 0
    %v102 = vsel %vm70, 1, 0
    %v103 = vsel %vm71, 1, 0
    %v104 = vcvt.s32.f32 %v72
    %v105 = vcvt.s32.f32 %v73
    %v106 = vcvt.s32.f32 %v74
    %v107 = vcvt.s32.f32 %v75
    %v108 = vcvt.s32.f32 %v76
    %v109 = vcvt.s32.f32 %v77
    %v110 = vcvt.s32.f32 %v78
    %v111 = vcvt.s32.f32 %v79
    %v112 = vcvt.s32.f32 %v80
    %v113 = vcvt.s32.f32 %v81
    %v114 = vcvt.s32.f32 %v82
    %v115 = vcvt.s32.f32 %v83
    %v116 = vcvt.s32.f32 %v84
    %v117 = vcvt.s32.f32 %v85
    %v118 = vcvt.s32.f32 %v86
    %v119 = vcvt.s32.f32 %v87
    %v120 = vcvt.s32.f32 %v88
    %v121 = vcvt.s32.f32 %v89
    %v122 = vcvt.s32.f32 %v90
    %v123 = vcvt.s32.f32 %v91
    %v124 = vcvt.s32.f32 %v92
    %v125 = vcvt.s32.f32 %v93
    %v126 = vcvt.s32.f32 %v94
    %v127 = vcvt.s32.f32 %v95
    %v128 = vcvt.s32.f32 %v96
    %v129 = vcvt.s32.f32 %v97
    %v130 = vcvt.s32.f32 %v98
    %v131 = vcvt.s32.f32 %v99
    %v132 = vcvt.s32.f32 %v100
    %v133 = vcvt.s32.f32 %v101
    %v134 = vcvt.s32.f32 %v102
    %v135 = vcvt.s32.f32 %v103
    %v136 = vrot.slane %v104, 4
    %v137 = vadd.f32 %v104, %v136
    %v138 = vrot.slane %v137, 2
    %v139 = vadd.f32 %v137, %v138
    %v140 = vrot.slane %v139, 1
    %v141 = vadd.f32 %v139, %v140
    %v142 = vrot.slane %v105, 4
    %v143 = vadd.f32 %v105, %v142
    %v144 = vrot.slane %v143, 2
    %v145 = vadd.f32 %v143, %v144
    %v146 = vrot.slane %v145, 1
    %v147 = vadd.f32 %v145, %v146
    %v148 = vrot.slane %v106, 4
    %v149 = vadd.f32 %v106, %v148
    %v150 = vrot.slane %v149, 2
    %v151 = vadd.f32 %v149, %v150
    %v152 = vrot.slane %v151, 1
    %v153 = vadd.f32 %v151, %v152
    %v154 = vrot.slane %v107, 4
    %v155 = vadd.f32 %v107, %v154
    %v156 = vrot.slane %v155, 2
    %v157 = vadd.f32 %v155, %v156
    %v158 = vrot.slane %v157, 1
    %v159 = vadd.f32 %v157, %v158
    %v160 = vrot.slane %v108, 4
    %v161 = vadd.f32 %v108, %v160
    %v162 = vrot.slane %v161, 2
    %v163 = vadd.f32 %v161, %v162
    %v164 = vrot.slane %v163, 1
    %v165 = vadd.f32 %v163, %v164
    %v166 = vrot.slane %v109, 4
    %v167 = vadd.f32 %v109, %v166
    %v168 = vrot.slane %v167, 2
    %v169 = vadd.f32 %v167, %v168
    %v170 = vrot.slane %v169, 1
    %v171 = vadd.f32 %v169, %v170
    %v172 = vrot.slane %v110, 4
    %v173 = vadd.f32 %v110, %v172
    %v174 = vrot.slane %v173, 2
    %v175 = vadd.f32 %v173, %v174
    %v176 = vrot.slane %v175, 1
    %v177 = vadd.f32 %v175, %v176
    %v178 = vrot.slane %v111, 4
    %v179 = vadd.f32 %v111, %v178
    %v180 = vrot.slane %v179, 2
    %v181 = vadd.f32 %v179, %v180
    %v182 = vrot.slane %v181, 1
    %v183 = vadd.f32 %v181, %v182
    %v184 = vrot.slane %v112, 4
    %v185 = vadd.f32 %v112, %v184
    %v186 = vrot.slane %v185, 2
    %v187 = vadd.f32 %v185, %v186
    %v188 = vrot.slane %v187, 1
    %v189 = vadd.f32 %v187, %v188
    %v190 = vrot.slane %v113, 4
    %v191 = vadd.f32 %v113, %v190
    %v192 = vrot.slane %v191, 2
    %v193 = vadd.f32 %v191, %v192
    %v194 = vrot.slane %v193, 1
    %v195 = vadd.f32 %v193, %v194
    %v196 = vrot.slane %v114, 4
    %v197 = vadd.f32 %v114, %v196
    %v198 = vrot.slane %v197, 2
    %v199 = vadd.f32 %v197, %v198
    %v200 = vrot.slane %v199, 1
    %v201 = vadd.f32 %v199, %v200
    %v202 = vrot.slane %v115, 4
    %v203 = vadd.f32 %v115, %v202
    %v204 = vrot.slane %v203, 2
    %v205 = vadd.f32 %v203, %v204
    %v206 = vrot.slane %v205, 1
    %v207 = vadd.f32 %v205, %v206
    %v208 = vrot.slane %v116, 4
    %v209 = vadd.f32 %v116, %v208
    %v210 = vrot.slane %v209, 2
    %v211 = vadd.f32 %v209, %v210
    %v212 = vrot.slane %v211, 1
    %v213 = vadd.f32 %v211, %v212
    %v214 = vrot.slane %v117, 4
    %v215 = vadd.f32 %v117, %v214
    %v216 = vrot.slane %v215, 2
    %v217 = vadd.f32 %v215, %v216
    %v218 = vrot.slane %v217, 1
    %v219 = vadd.f32 %v217, %v218
    %v220 = vrot.slane %v118, 4
    %v221 = vadd.f32 %v118, %v220
    %v222 = vrot.slane %v221, 2
    %v223 = vadd.f32 %v221, %v222
    %v224 = vrot.slane %v223, 1
    %v225 = vadd.f32 %v223, %v224
    %v226 = vrot.slane %v119, 4
    %v227 = vadd.f32 %v119, %v226
    %v228 = vrot.slane %v227, 2
    %v229 = vadd.f32 %v227, %v228
    %v230 = vrot.slane %v229, 1
    %v231 = vadd.f32 %v229, %v230
    %v232 = vrot.slane %v120, 4
    %v233 = vadd.f32 %v120, %v232
    %v234 = vrot.slane %v233, 2
    %v235 = vadd.f32 %v233, %v234
    %v236 = vrot.slane %v235, 1
    %v237 = vadd.f32 %v235, %v236
    %v238 = vrot.slane %v121, 4
    %v239 = vadd.f32 %v121, %v238
    %v240 = vrot.slane %v239, 2
    %v241 = vadd.f32 %v239, %v240
    %v242 = vrot.slane %v241, 1
    %v243 = vadd.f32 %v241, %v242
    %v244 = vrot.slane %v122, 4
    %v245 = vadd.f32 %v122, %v244
    %v246 = vrot.slane %v245, 2
    %v247 = vadd.f32 %v245, %v246
    %v248 = vrot.slane %v247, 1
    %v249 = vadd.f32 %v247, %v248
    %v250 = vrot.slane %v123, 4
    %v251 = vadd.f32 %v123, %v250
    %v252 = vrot.slane %v251, 2
    %v253 = vadd.f32 %v251, %v252
    %v254 = vrot.slane %v253, 1
    %v255 = vadd.f32 %v253, %v254
    %v256 = vrot.slane %v124, 4
    %v257 = vadd.f32 %v124, %v256
    %v258 = vrot.slane %v257, 2
    %v259 = vadd.f32 %v257, %v258
    %v260 = vrot.slane %v259, 1
    %v261 = vadd.f32 %v259, %v260
    %v262 = vrot.slane %v125, 4
    %v263 = vadd.f32 %v125, %v262
    %v264 = vrot.slane %v263, 2
    %v265 = vadd.f32 %v263, %v264
    %v266 = vrot.slane %v265, 1
    %v267 = vadd.f32 %v265, %v266
    %v268 = vrot.slane %v126, 4
    %v269 = vadd.f32 %v126, %v268
    %v270 = vrot.slane %v269, 2
    %v271 = vadd.f32 %v269, %v270
    %v272 = vrot.slane %v271, 1
    %v273 = vadd.f32 %v271, %v272
    %v274 = vrot.slane %v127, 4
    %v275 = vadd.f32 %v127, %v274
    %v276 = vrot.slane %v275, 2
    %v277 = vadd.f32 %v275, %v276
    %v278 = vrot.slane %v277, 1
    %v279 = vadd.f32 %v277, %v278
    %v280 = vrot.slane %v128, 4
    %v281 = vadd.f32 %v128, %v280
    %v282 = vrot.slane %v281, 2
    %v283 = vadd.f32 %v281, %v282
    %v284 = vrot.slane %v283, 1
    %v285 = vadd.f32 %v283, %v284
    %v286 = vrot.slane %v129, 4
    %v287 = vadd.f32 %v129, %v286
    %v288 = vrot.slane %v287, 2
    %v289 = vadd.f32 %v287, %v288
    %v290 = vrot.slane %v289, 1
    %v291 = vadd.f32 %v289, %v290
    %v292 = vrot.slane %v130, 4
    %v293 = vadd.f32 %v130, %v292
    %v294 = vrot.slane %v293, 2
    %v295 = vadd.f32 %v293, %v294
    %v296 = vrot.slane %v295, 1
    %v297 = vadd.f32 %v295, %v296
    %v298 = vrot.slane %v131, 4
    %v299 = vadd.f32 %v131, %v298
    %v300 = vrot.slane %v299, 2
    %v301 = vadd.f32 %v299, %v300
    %v302 = vrot.slane %v301, 1
    %v303 = vadd.f32 %v301, %v302
    %v304 = vrot.slane %v132, 4
    %v305 = vadd.f32 %v132, %v304
    %v306 = vrot.slane %v305, 2
    %v307 = vadd.f32 %v305, %v306
    %v308 = vrot.slane %v307, 1
    %v309 = vadd.f32 %v307, %v308
    %v310 = vrot.slane %v133, 4
    %v311 = vadd.f32 %v133, %v310
    %v312 = vrot.slane %v311, 2
    %v313 = vadd.f32 %v311, %v312
    %v314 = vrot.slane %v313, 1
    %v315 = vadd.f32 %v313, %v314
    %v316 = vrot.slane %v134, 4
    %v317 = vadd.f32 %v134, %v316
    %v318 = vrot.slane %v317, 2
    %v319 = vadd.f32 %v317, %v318
    %v320 = vrot.slane %v319, 1
    %v321 = vadd.f32 %v319, %v320
    %v322 = vrot.slane %v135, 4
    %v323 = vadd.f32 %v135, %v322
    %v324 = vrot.slane %v323, 2
    %v325 = vadd.f32 %v323, %v324
    %v326 = vrot.slane %v325, 1
    %v327 = vadd.f32 %v325, %v326
    %v328 = vld [vmem:[#allocation5] sm:$0xf]
    %v329 = vld [vmem:[#allocation5 + $0x4] sm:$0xf]
    %v330 = vld [vmem:[#allocation5 + $0x8] sm:$0xf]
    %v331 = vld [vmem:[#allocation5 + $0xc] sm:$0xf]
    %v332 = vpack.c.bf16 %v141, %v141
    %v333 = vpack.c.bf16 %v147, %v147
    %v334 = vpack.c.bf16 %v153, %v153
    %v335 = vpack.c.bf16 %v159, %v159
    %v336 = vpack.c.bf16 %v165, %v165
    %v337 = vpack.c.bf16 %v171, %v171
    %v338 = vpack.c.bf16 %v177, %v177
    %v339 = vpack.c.bf16 %v183, %v183
    %v340 = vpack.c.bf16 %v189, %v189
    %v341 = vpack.c.bf16 %v195, %v195
    %v342 = vpack.c.bf16 %v201, %v201
    %v343 = vpack.c.bf16 %v207, %v207
    %v344 = vpack.c.bf16 %v213, %v213
    %v345 = vpack.c.bf16 %v219, %v219
    %v346 = vpack.c.bf16 %v225, %v225
    %v347 = vpack.c.bf16 %v231, %v231
    %v348 = vpack.c.bf16 %v237, %v237
    %v349 = vpack.c.bf16 %v243, %v243
    %v350 = vpack.c.bf16 %v249, %v249
    %v351 = vpack.c.bf16 %v255, %v255
    %v352 = vpack.c.bf16 %v261, %v261
    %v353 = vpack.c.bf16 %v267, %v267
    %v354 = vpack.c.bf16 %v273, %v273
    %v355 = vpack.c.bf16 %v279, %v279
    %v356 = vpack.c.bf16 %v285, %v285
    %v357 = vpack.c.bf16 %v291, %v291
    %v358 = vpack.c.bf16 %v297, %v297
    %v359 = vpack.c.bf16 %v303, %v303
    %v360 = vpack.c.bf16 %v309, %v309
    %v361 = vpack.c.bf16 %v315, %v315
    %v362 = vpack.c.bf16 %v321, %v321
    %v363 = vpack.c.bf16 %v327, %v327
    %v368 = vunpack.c.l.b16 %v328
    %v369 = vunpack.c.l.b16 %v329
    %v370 = vunpack.c.l.b16 %v330
    %v371 = vunpack.c.l.b16 %v331
    %v372 = vpack.c.b16 %v369, %v368
    %v373 = vpack.c.b16 %v371, %v370
    %v406 = vunpack.c.l.b16 %v332
    %v407 = vunpack.c.l.b16 %v333
    %v408 = vunpack.c.l.b16 %v334
    %v409 = vunpack.c.l.b16 %v335
    %v410 = vunpack.c.l.b16 %v336
    %v411 = vunpack.c.l.b16 %v337
    %v412 = vunpack.c.l.b16 %v338
    %v413 = vunpack.c.l.b16 %v339
    %v414 = vunpack.c.l.b16 %v340
    %v415 = vunpack.c.l.b16 %v341
    %v416 = vunpack.c.l.b16 %v342
    %v417 = vunpack.c.l.b16 %v343
    %v418 = vunpack.c.l.b16 %v344
    %v419 = vunpack.c.l.b16 %v345
    %v420 = vunpack.c.l.b16 %v346
    %v421 = vunpack.c.l.b16 %v347
    %v422 = vunpack.c.l.b16 %v348
    %v423 = vunpack.c.l.b16 %v349
    %v424 = vunpack.c.l.b16 %v350
    %v425 = vunpack.c.l.b16 %v351
    %v426 = vunpack.c.l.b16 %v352
    %v427 = vunpack.c.l.b16 %v353
    %v428 = vunpack.c.l.b16 %v354
    %v429 = vunpack.c.l.b16 %v355
    %v430 = vunpack.c.l.b16 %v356
    %v431 = vunpack.c.l.b16 %v357
    %v432 = vunpack.c.l.b16 %v358
    %v433 = vunpack.c.l.b16 %v359
    %v434 = vunpack.c.l.b16 %v360
    %v435 = vunpack.c.l.b16 %v361
    %v436 = vunpack.c.l.b16 %v362
    %v437 = vunpack.c.l.b16 %v363
    %vm438 = vcmask 1041409
    %v439 = vsel %vm438, %v407, %v406
    %vm440 = vcmask 1042434
    %v441 = vsel %vm440, %v408, %v439
    %vm442 = vcmask 1043459
    %v443 = vsel %vm442, %v409, %v441
    %vm444 = vcmask 1044484
    %v445 = vsel %vm444, %v410, %v443
    %vm446 = vcmask 1045509
    %v447 = vsel %vm446, %v411, %v445
    %vm448 = vcmask 1046534
    %v449 = vsel %vm448, %v412, %v447
    %vm450 = vcmask 1047559
    %v451 = vsel %vm450, %v413, %v449
    %v452 = vsel %vm438, %v415, %v414
    %v453 = vsel %vm440, %v416, %v452
    %v454 = vsel %vm442, %v417, %v453
    %v455 = vsel %vm444, %v418, %v454
    %v456 = vsel %vm446, %v419, %v455
    %v457 = vsel %vm448, %v420, %v456
    %v458 = vsel %vm450, %v421, %v457
    %v459 = vsel %vm438, %v423, %v422
    %v460 = vsel %vm440, %v424, %v459
    %v461 = vsel %vm442, %v425, %v460
    %v462 = vsel %vm444, %v426, %v461
    %v463 = vsel %vm446, %v427, %v462
    %v464 = vsel %vm448, %v428, %v463
    %v465 = vsel %vm450, %v429, %v464
    %v466 = vsel %vm438, %v431, %v430
    %v467 = vsel %vm440, %v432, %v466
    %v468 = vsel %vm442, %v433, %v467
    %v469 = vsel %vm444, %v434, %v468
    %v470 = vsel %vm446, %v435, %v469
    %v471 = vsel %vm448, %v436, %v470
    %v472 = vsel %vm450, %v437, %v471
    %v473 = vpack.c.b16 %v458, %v451
    %v474 = vpack.c.b16 %v472, %v465
    %vm477 = vcmask 261120
    %v479 = vsel %vm477, %v372, 0
    %v482 = vsel %vm477, %v373, 0
    %484 = vmatprep.subr.bf16.mxu0 0
    %485 = vmatpush1.bf16.msra.mxu0 %v473
    %486 = vmatprep.subr.bf16.mxu0 0
    %487 = vmatpush1.bf16.msra.mxu0 %v474
    %488 = vmatprep.subr.bf16.mxu0 0
    %489 = vmatpush1.bf16.msra.mxu0 0
    %490 = vmatprep.subr.bf16.mxu0 0
    %491 = vmatpush1.bf16.msra.mxu0 0
    %492 = vmatprep.subr.bf16.mxu0 0
    %493 = vmatpush1.bf16.msra.mxu0 0
    %494 = vmatprep.subr.bf16.mxu0 0
    %495 = vmatpush1.bf16.msra.mxu0 0
    %496 = vmatprep.subr.bf16.mxu0 0
    %497 = vmatpush1.bf16.msra.mxu0 0
    %498 = vmatprep.subr.bf16.mxu0 0
    %499 = vmatpush1.bf16.msra.mxu0 0
    %500 = vmatprep.subr.bf16.mxu0 0
    %501 = vmatpush1.bf16.msra.mxu0 0
    %502 = vmatprep.subr.bf16.mxu0 0
    %503 = vmatpush1.bf16.msra.mxu0 0
    %504 = vmatprep.subr.bf16.mxu0 0
    %505 = vmatpush1.bf16.msra.mxu0 0
    %506 = vmatprep.subr.bf16.mxu0 0
    %507 = vmatpush1.bf16.msra.mxu0 0
    %508 = vmatprep.subr.bf16.mxu0 0
    %509 = vmatpush1.bf16.msra.mxu0 0
    %510 = vmatprep.subr.bf16.mxu0 0
    %511 = vmatpush1.bf16.msra.mxu0 0
    %512 = vmatprep.subr.bf16.mxu0 0
    %513 = vmatpush1.bf16.msra.mxu0 0
    %514 = vmatprep.subr.bf16.mxu0 0
    %515 = vmatpush1.bf16.msra.mxu0 0
    %516 = vmatprep.mubr.bf16.mxu0 0
    %517 = vmatmul.mubr.bf16.gmra.mrb[0].mxu0 %v479
    %v518 = vpop.f32.mrb[0].mxu0
    %v519 = vadd.f32 0.0, %v518
    %v520 = vpop.f32.mrb[0].mxu0
    %v521 = vpop.f32.mrb[0].mxu0
    %v522 = vadd.f32 0.0, %v521
    %v523 = vpop.f32.mrb[0].mxu0
    %524 = vmatprep.mubr.bf16.mxu0 0
    %525 = vmatmul.mubr.bf16.gmra.mrb[0].mxu0 %v482
    %v526 = vpop.f32.mrb[0].mxu0
    %v527 = vadd.f32 0.0, %v526
    %v528 = vpop.f32.mrb[0].mxu0
    %v529 = vpop.f32.mrb[0].mxu0
    %v530 = vadd.f32 0.0, %v529
    %v531 = vpop.f32.mrb[0].mxu0
    %532 = vdwg.mxu0
    %v533 = vtanh.pop %v519
    %v534 = vtanh.pop %v522
    %v535 = vtanh.pop %v527
    %v536 = vtanh.pop %v530
    %537 = vst [vmem:[#allocation7] sm:$0xff] %v533
    %538 = vst [vmem:[#allocation7 + $0x8] sm:$0xff] %v534
    %539 = vst [vmem:[#allocation7 + $0x10] sm:$0xff] %v535
    %540 = vst [vmem:[#allocation7 + $0x18] sm:$0xff] %v536
    // Predicated region
    $region18: #{tpu_custom_call.1} parent=1 // pred_check
      _
    $region19: #{tpu_custom_call.1} parent=1 // pred_check_branch
      %542 = sbr.rel (0) target = $region21
    $region20: #{tpu_custom_call.1} parent=1 // pred_region
      %s544 = ssub.s32 512, 512
      %545 = vsyncadd [#allocation4], %s544
      %s546 = sshll.u32 [#allocation7], 4
      %s547 = int_to_ptr.vmem [resolvable:$true] %s546
      %552 = dma.vmem_to_hbm [thread:$0]  %s547, 512, %s2, [#allocation4], 128, 128, 8
    $region21: #{tpu_custom_call.1} parent=1 // pred_fallthru
      _
    // Predicated region
    $region22: #{tpu_custom_call.1} parent=1 // pred_check
      _
    $region23: #{tpu_custom_call.1} parent=1 // pred_check_branch
      %554 = sbr.rel (0) target = $region25
    $region24: #{tpu_custom_call.1} parent=1 // pred_region
      %555 = dma.done [#allocation4], 512
    $region25: #{tpu_custom_call.1} parent=1 // pred_fallthru
      _
    %556 = vsyncpa [#allocation3], 1
    %557 = vsyncpa [#allocation6], 1
    %558 = vsyncpa [#allocation4], 1

</llo_original>
